<compile_context>
chip_gen: v7x
topology: tpu7x:2x2x1
jax: 0.10.0
libtpu: 0.0.40
codegen_flags: <defaults>
</compile_context>

<pallas_src>
import functools

import jax
import jax.numpy as jnp
from jax.experimental import pallas as pl
from jax.experimental.pallas import tpu as pltpu


def _round_up(x, m):
    return (x + m - 1) // m * m


def _sublane_pack_rows(dtype):
    """Rows per packed sublane tile: f32 -> 8, bf16 -> 16, int8/fp8 -> 32."""
    return 8 * (4 // jnp.dtype(dtype).itemsize)


def _make_mlp_kernel(n_layers, obs_rows, width, act_dim, bias_rows, compute_dtype):
    """Whole MLP on one batch tile.

    x_ref: (tile_m, obs_rows)    activations (f32 or bf16)
    p_ref: (packed_rows, width)  packed, zero-padded weights + biases (segment-aligned)
    o_ref: (tile_m, act_dim)     lane-compact output (f32 or bf16)
    """

    def kernel(x_ref, p_ref, o_ref):
        h = x_ref[...].astype(compute_dtype)
        row = 0
        rows_in = obs_rows
        a = None
        for li in range(n_layers):
            w = p_ref[row:row + rows_in, :]                    # static, pack-aligned slice
            row += rows_in
            b = p_ref[row:row + 1, :].astype(jnp.float32)      # (1, width) bias row
            row += bias_rows
            a = jnp.dot(h, w, preferred_element_type=jnp.float32) + b
            if li < n_layers - 1:
                h = jnp.maximum(a, 0.0).astype(compute_dtype)  # ReLU in f32, then narrow
            rows_in = width
        # Lane-compact store: only the real act_dim lanes go back to HBM.
        o_ref[...] = a[:, :act_dim].astype(o_ref.dtype)

    return kernel


def _pack_params(params, obs_rows, width, bias_rows, dtype):
    """Concatenate all layers' (W, b) into one lane-dense, zero-padded, pack-aligned buffer."""
    segs = []
    rows_in = obs_rows
    for w, b in params:
        w_pad = jnp.zeros((rows_in, width), dtype).at[:w.shape[0], :w.shape[1]].set(
            w.astype(dtype))
        b_pad = jnp.zeros((bias_rows, width), dtype).at[0, :b.shape[-1]].set(
            b.reshape(-1).astype(dtype))
        segs += [w_pad, b_pad]
        rows_in = width
    return jnp.concatenate(segs, axis=0)


def mlp_forward(x, params, *, param_dtype=jnp.float32, out_dtype=None,
                tile_m=2048, target_grid_steps=4, small_batch_max=512):
    """x: (batch, obs_dim). params: list of (W (in,out), b (1,out)).

    Returns (batch, act_dim).  Output dtype is f32 for param_dtype=f32, otherwise it
    follows param_dtype (e.g. bf16) unless out_dtype is given explicitly.
    On the bf16 path, x and W are quantized to bf16 before the matmuls (f32 accumulate).
    small_batch_max is tunable per generation (~1024 is fine on single-TC v5e/v6e;
    keep it lower on v7x so medium batches still reach the 2-core gridded path).
    """
    batch, obs_dim = x.shape
    n_layers = len(params)
    act_dim = params[-1][0].shape[1]

    if out_dtype is None:
        out_dtype = jnp.float32 if jnp.dtype(param_dtype) == jnp.float32 else jnp.dtype(param_dtype)

    itemsize = jnp.dtype(param_dtype).itemsize
    out_itemsize = jnp.dtype(out_dtype).itemsize

    # Lane-dense padded width (hidden/output width padded to a multiple of 128 lanes);
    # row padding aligned to the dtype's sublane pack so packed slices never straddle tiles.
    row_align = _sublane_pack_rows(param_dtype)
    width = _round_up(max(w.shape[1] for w, _ in params), 128)
    obs_rows = _round_up(obs_dim, row_align)
    bias_rows = row_align

    packed = _pack_params(params, obs_rows, width, bias_rows, param_dtype)

    x = x.astype(param_dtype)
    if obs_rows != obs_dim:
        x = jnp.pad(x, ((0, 0), (0, obs_rows - obs_dim)))

    kernel = _make_mlp_kernel(n_layers, obs_rows, width, act_dim, bias_rows, param_dtype)

    flops = 2 * batch * sum(w.shape[0] * w.shape[1] for w, _ in params)
    bytes_accessed = (batch * obs_rows * itemsize      # activations in
                      + packed.size * itemsize         # weights + biases
                      + batch * act_dim * out_itemsize)  # lane-compact output
    cost = pl.CostEstimate(flops=int(flops), transcendentals=0,
                           bytes_accessed=int(bytes_accessed))

    if batch <= small_batch_max:
        # Tiny-batch / inference path: no grid, everything VMEM-resident in one shot.
        vmem = pl.BlockSpec(memory_space=pltpu.MemorySpace.VMEM)
        return pl.pallas_call(
            kernel,
            out_shape=jax.ShapeDtypeStruct((batch, act_dim), out_dtype),
            in_specs=[vmem, vmem],
            out_specs=vmem,
            cost_estimate=cost,
        )(x, packed)

    # Large-batch path: batch-tiled grid.  Tile is as large as possible while keeping
    # >= ~target_grid_steps grid steps so v7x can shard across both TensorCores.
    tile_cap = _round_up(-(-batch // target_grid_steps), 8)
    tm = max(256, min(tile_m, tile_cap))
    batch_pad = _round_up(batch, tm)
    if batch_pad != batch:
        x = jnp.pad(x, ((0, batch_pad - batch), (0, 0)))

    # Explicit VMEM budget: double-buffered in/out tiles + (double-buffered) params
    # + generous allowance for f32 layer intermediates.  Well under v7x's 64 MiB.
    need = (2 * tm * obs_rows * itemsize
            + 2 * tm * act_dim * out_itemsize
            + 2 * packed.size * itemsize
            + 6 * tm * width * 4)
    vmem_limit = int(min(64 << 20, max(24 << 20, 2 * need)))

    out = pl.pallas_call(
        kernel,
        out_shape=jax.ShapeDtypeStruct((batch_pad, act_dim), out_dtype),
        grid=(batch_pad // tm,),
        in_specs=[
            pl.BlockSpec((tm, obs_rows), lambda i: (i, 0)),
            pl.BlockSpec(packed.shape, lambda i: (0, 0)),   # params stay VMEM-resident
        ],
        out_specs=pl.BlockSpec((tm, act_dim), lambda i: (i, 0)),
        compiler_params=pltpu.CompilerParams(
            dimension_semantics=("parallel",),
            vmem_limit_bytes=vmem_limit),
        cost_estimate=cost,
    )(x, packed)
    return out if batch_pad == batch else out[:batch]


def init_params(key, obs_dim, act_dim, hidden_layers=(64, 64, 64)):
    """Deterministic init mimicking nn.Linear default: U(-1/sqrt(fan_in), 1/sqrt(fan_in))."""
    dims = [obs_dim] + list(hidden_layers) + [act_dim]
    params = []
    for i in range(len(dims) - 1):
        fan_in, fan_out = dims[i], dims[i + 1]
        key, kw, kb = jax.random.split(key, 3)
        bound = 1.0 / jnp.sqrt(jnp.float32(fan_in))
        w = jax.random.uniform(kw, (fan_in, fan_out), jnp.float32, -bound, bound)
        b = jax.random.uniform(kb, (1, fan_out), jnp.float32, -bound, bound)
        params.append((w, b))
    return params


def mlp_reference(x, params):
    h = x
    for i, (w, b) in enumerate(params):
        h = h @ w + b
        if i < len(params) - 1:
            h = jnp.maximum(h, 0.0)
    return h


if __name__ == "__main__":
    obs_dim, act_dim = 32, 8

    key = jax.random.PRNGKey(0)
    key, kx = jax.random.split(key)
    params = init_params(key, obs_dim, act_dim)

    mlp_f32 = jax.jit(mlp_forward)
    mlp_bf16 = jax.jit(functools.partial(mlp_forward, param_dtype=jnp.bfloat16))

    # --- Small-batch (grid-less, fully VMEM-resident) path -------------------------------
    x_small = jax.random.normal(kx, (8, obs_dim), jnp.float32)
    out_small = jax.block_until_ready(mlp_f32(x_small, params))
    ref_small = mlp_reference(x_small, params)
    assert out_small.shape == (8, act_dim)
    assert jnp.allclose(out_small, ref_small, atol=1e-5, rtol=1e-5), "small-batch mismatch"

    # --- Large-batch (batch-tiled, 'parallel' grid, lane-compact output) path -------------
    key, kx2 = jax.random.split(key)
    x_big = jax.random.normal(kx2, (1000, obs_dim), jnp.float32)
    out_big = jax.block_until_ready(mlp_f32(x_big, params))
    ref_big = mlp_reference(x_big, params)
    assert out_big.shape == (1000, act_dim)
    assert jnp.allclose(out_big, ref_big, atol=1e-5, rtol=1e-5), "large-batch mismatch"

    # --- bf16-operand path (recommended on all generations incl. v5e): f32 accumulate,
    #     bf16 output, looser tolerance vs f32 reference ------------------------------------
    out_bf16 = jax.block_until_ready(mlp_bf16(x_big, params))
    assert out_bf16.shape == (1000, act_dim)
    assert jnp.allclose(out_bf16.astype(jnp.float32), ref_big, atol=5e-2, rtol=5e-2), \
        "bf16 path mismatch"

    print("KERNEL_OK")
</pallas_src>

<mosaic_0001>
module attributes {stable_mosaic.version = 11 : i64} {
  func.func @kernel(%arg0: memref<8x32xf32, #tpu.memory_space<vmem>>, %arg1: memref<448x128xf32, #tpu.memory_space<vmem>>, %arg2: memref<8x8xf32, #tpu.memory_space<vmem>>) attributes {dimension_semantics = [], scalar_prefetch = 0 : i64, scratch_operands = 0 : i64, tpu.core_type = #tpu.core_type<tc>} {
    %c0 = arith.constant 0 : index
    %c0_0 = arith.constant 0 : index
    %0 = vector.load %arg0[%c0, %c0_0] : memref<8x32xf32, #tpu.memory_space<vmem>>, vector<8x32xf32>
    %c0_1 = arith.constant 0 : index
    %c0_2 = arith.constant 0 : index
    %1 = vector.load %arg1[%c0_1, %c0_2] : memref<448x128xf32, #tpu.memory_space<vmem>>, vector<32x128xf32>
    %c32 = arith.constant 32 : index
    %c0_3 = arith.constant 0 : index
    %2 = vector.load %arg1[%c32, %c0_3] : memref<448x128xf32, #tpu.memory_space<vmem>>, vector<1x128xf32>
    %cst = arith.constant dense<0.000000e+00> : vector<8x128xf32>
    %3 = tpu.matmul %0, %1, %cst {dimension_numbers = #tpu.dot_dimension_numbers<[1], [0], [0], [1], [0, 0, 1, 1], [], []>} : vector<8x32xf32>, vector<32x128xf32>, vector<8x128xf32> -> vector<8x128xf32>
    %4 = vector.broadcast %2 : vector<1x128xf32> to vector<8x128xf32>
    %5 = arith.addf %3, %4 : vector<8x128xf32>
    %cst_4 = arith.constant 0.000000e+00 : f32
    %6 = vector.broadcast %cst_4 : f32 to vector<8x128xf32>
    %7 = arith.maximumf %5, %6 : vector<8x128xf32>
    %c40 = arith.constant 40 : index
    %c0_5 = arith.constant 0 : index
    %8 = vector.load %arg1[%c40, %c0_5] : memref<448x128xf32, #tpu.memory_space<vmem>>, vector<128x128xf32>
    %c168 = arith.constant 168 : index
    %c0_6 = arith.constant 0 : index
    %9 = vector.load %arg1[%c168, %c0_6] : memref<448x128xf32, #tpu.memory_space<vmem>>, vector<1x128xf32>
    %cst_7 = arith.constant dense<0.000000e+00> : vector<8x128xf32>
    %10 = tpu.matmul %7, %8, %cst_7 {dimension_numbers = #tpu.dot_dimension_numbers<[1], [0], [0], [1], [0, 0, 1, 1], [], []>} : vector<8x128xf32>, vector<128x128xf32>, vector<8x128xf32> -> vector<8x128xf32>
    %11 = vector.broadcast %9 : vector<1x128xf32> to vector<8x128xf32>
    %12 = arith.addf %10, %11 : vector<8x128xf32>
    %cst_8 = arith.constant 0.000000e+00 : f32
    %13 = vector.broadcast %cst_8 : f32 to vector<8x128xf32>
    %14 = arith.maximumf %12, %13 : vector<8x128xf32>
    %c176 = arith.constant 176 : index
    %c0_9 = arith.constant 0 : index
    %15 = vector.load %arg1[%c176, %c0_9] : memref<448x128xf32, #tpu.memory_space<vmem>>, vector<128x128xf32>
    %c304 = arith.constant 304 : index
    %c0_10 = arith.constant 0 : index
    %16 = vector.load %arg1[%c304, %c0_10] : memref<448x128xf32, #tpu.memory_space<vmem>>, vector<1x128xf32>
    %cst_11 = arith.constant dense<0.000000e+00> : vector<8x128xf32>
    %17 = tpu.matmul %14, %15, %cst_11 {dimension_numbers = #tpu.dot_dimension_numbers<[1], [0], [0], [1], [0, 0, 1, 1], [], []>} : vector<8x128xf32>, vector<128x128xf32>, vector<8x128xf32> -> vector<8x128xf32>
    %18 = vector.broadcast %16 : vector<1x128xf32> to vector<8x128xf32>
    %19 = arith.addf %17, %18 : vector<8x128xf32>
    %cst_12 = arith.constant 0.000000e+00 : f32
    %20 = vector.broadcast %cst_12 : f32 to vector<8x128xf32>
    %21 = arith.maximumf %19, %20 : vector<8x128xf32>
    %c312 = arith.constant 312 : index
    %c0_13 = arith.constant 0 : index
    %22 = vector.load %arg1[%c312, %c0_13] : memref<448x128xf32, #tpu.memory_space<vmem>>, vector<128x128xf32>
    %c440 = arith.constant 440 : index
    %c0_14 = arith.constant 0 : index
    %23 = vector.load %arg1[%c440, %c0_14] : memref<448x128xf32, #tpu.memory_space<vmem>>, vector<1x128xf32>
    %cst_15 = arith.constant dense<0.000000e+00> : vector<8x128xf32>
    %24 = tpu.matmul %21, %22, %cst_15 {dimension_numbers = #tpu.dot_dimension_numbers<[1], [0], [0], [1], [0, 0, 1, 1], [], []>} : vector<8x128xf32>, vector<128x128xf32>, vector<8x128xf32> -> vector<8x128xf32>
    %25 = vector.broadcast %23 : vector<1x128xf32> to vector<8x128xf32>
    %26 = arith.addf %24, %25 : vector<8x128xf32>
    %27 = vector.extract_strided_slice %26 {offsets = [0, 0], sizes = [8, 8], strides = [1, 1]} : vector<8x128xf32> to vector<8x8xf32>
    %c0_16 = arith.constant 0 : index
    %c0_17 = arith.constant 0 : index
    %28 = vector.load %arg2[%c0_16, %c0_17] : memref<8x8xf32, #tpu.memory_space<vmem>>, vector<8x8xf32>
    tpu.vector_store %arg2[%c0_16, %c0_17], %27 {strides = array<i32>} : memref<8x8xf32, #tpu.memory_space<vmem>>, vector<8x8xf32>,
    return
  }
}

</mosaic_0001>

<llo_original>
// kernel: mlp_forward.1
$region0: #{mlp_forward.1}
  #allocation0 [shape = 'u32[]', space=smem, size = 0x4, offset = 0x4, fixed_abs, tag = 'smem constant byte address 0x4 - core index']
  #allocation1 [shape = 'u32[144,128]{1,0:T(1,128)}', space=vmem, size = 0x12000, scoped, tag = 'internal scratch']
  %s0 = inlined_call_operand.vmem [shape: f32[8,32], index: 0, kind: input, shape index: {}]
  %s1 = inlined_call_operand.vmem [shape: f32[448,128], index: 1, kind: input, shape index: {}]
  %s2 = inlined_call_operand.hbm [shape: f32[8,8], index: 2, kind: output, shape index: {}]
  %s3 = sld [smem:[#allocation0]]
  $region18: #{mlp_forward.1} parent=0
    _
  %s5 = ssub.s32 1, %s3
  %s6 = scalar_select 0, %s5, %s3
  $region1: #{mlp_forward.1} parent=0
    #allocation2 [shape = 'u8[4096]{0}', space=vmem, size = 0x1000, scoped, tag = 'output window, operand 0, single buffered']
    #allocation3 [shape = 's32[1]{0}', space=sflag, size = 0x4, scoped, tag = 'scoped memory for mlp_forward.1']
    %7 = vsyncpa [#allocation3], 0
    // Predicated region
    $region2: #{mlp_forward.1} parent=1 // pred_check
      _
    $region3: #{mlp_forward.1} parent=1 // pred_check_branch
      %9 = sbr.rel (0) target = $region5
    $region4: #{mlp_forward.1} parent=1 // pred_region
      _
    $region5: #{mlp_forward.1} parent=1 // pred_fallthru
      _
    // Predicated region
    $region6: #{mlp_forward.1} parent=1 // pred_check
      _
    $region7: #{mlp_forward.1} parent=1 // pred_check_branch
      %11 = sbr.rel (0) target = $region9
    $region8: #{mlp_forward.1} parent=1 // pred_region
      _
    $region9: #{mlp_forward.1} parent=1 // pred_fallthru
      _
    %v12 = vld [vmem:[%s0] sm:$0xff]
    %v13 = vld [vmem:[%s1] sm:$0xff]
    %v14 = vld [vmem:[%s1 + $0x8] sm:$0xff]
    %v15 = vld [vmem:[%s1 + $0x10] sm:$0xff]
    %v16 = vld [vmem:[%s1 + $0x18] sm:$0xff]
    %v17 = vld [vmem:[%s1 + $0x20] sm:$0x1]
    %v18 = vlaneseq
    %v19 = vshrl.u32 %v18, 7
    %v20 = vsub.s32 0, %v19
    %v21 = vrot.slane %v17, %v20
    %vm22 = vcmask 261120
    %v24 = vsel %vm22, %v12, 0
    %26 = vmatprep.subr.mxu0 0.0
    %27 = vmatpush1.msra.mxu0 %v13
    %28 = vmatprep.subr.mxu0 0.0
    %29 = vmatpush1.msra.mxu0 %v14
    %30 = vmatprep.subr.mxu0 0.0
    %31 = vmatpush1.msra.mxu0 %v15
    %32 = vmatprep.subr.mxu0 0.0
    %33 = vmatpush1.msra.mxu0 %v16
    %34 = vmatprep.subr.mxu0 0.0
    %35 = vmatpush1.msra.mxu0 0.0
    %36 = vmatprep.subr.mxu0 0.0
    %37 = vmatpush1.msra.mxu0 0.0
    %38 = vmatprep.subr.mxu0 0.0
    %39 = vmatpush1.msra.mxu0 0.0
    %40 = vmatprep.subr.mxu0 0.0
    %41 = vmatpush1.msra.mxu0 0.0
    %42 = vmatprep.subr.mxu0 0.0
    %43 = vmatpush1.msra.mxu0 0.0
    %44 = vmatprep.subr.mxu0 0.0
    %45 = vmatpush1.msra.mxu0 0.0
    %46 = vmatprep.subr.mxu0 0.0
    %47 = vmatpush1.msra.mxu0 0.0
    %48 = vmatprep.subr.mxu0 0.0
    %49 = vmatpush1.msra.mxu0 0.0
    %50 = vmatprep.subr.mxu0 0.0
    %51 = vmatpush1.msra.mxu0 0.0
    %52 = vmatprep.subr.mxu0 0.0
    %53 = vmatpush1.msra.mxu0 0.0
    %54 = vmatprep.subr.mxu0 0.0
    %55 = vmatpush1.msra.mxu0 0.0
    %56 = vmatprep.subr.mxu0 0.0
    %57 = vmatpush1.msra.mxu0 0.0
    %58 = vmatprep.subr.mxu0 0.0
    %59 = vmatpush1.msra.mxu0 0.0
    %60 = vmatprep.subr.mxu0 0.0
    %61 = vmatpush1.msra.mxu0 0.0
    %62 = vmatprep.subr.mxu0 0.0
    %63 = vmatpush1.msra.mxu0 0.0
    %64 = vmatprep.subr.mxu0 0.0
    %65 = vmatpush1.msra.mxu0 0.0
    %66 = vmatprep.subr.mxu0 0.0
    %67 = vmatpush1.msra.mxu0 0.0
    %68 = vmatprep.subr.mxu0 0.0
    %69 = vmatpush1.msra.mxu0 0.0
    %70 = vmatprep.subr.mxu0 0.0
    %71 = vmatpush1.msra.mxu0 0.0
    %72 = vmatprep.subr.mxu0 0.0
    %73 = vmatpush1.msra.mxu0 0.0
    %74 = vmatprep.subr.mxu0 0.0
    %75 = vmatpush1.msra.mxu0 0.0
    %76 = vmatprep.subr.mxu0 0.0
    %77 = vmatpush1.msra.mxu0 0.0
    %78 = vmatprep.subr.mxu0 0.0
    %79 = vmatpush1.msra.mxu0 0.0
    %80 = vmatprep.subr.mxu0 0.0
    %81 = vmatpush1.msra.mxu0 0.0
    %82 = vmatprep.subr.mxu0 0.0
    %83 = vmatpush1.msra.mxu0 0.0
    %84 = vmatprep.subr.mxu0 0.0
    %85 = vmatpush1.msra.mxu0 0.0
    %86 = vmatprep.subr.mxu0 0.0
    %87 = vmatpush1.msra.mxu0 0.0
    %88 = vmatprep.subr.mxu0 0.0
    %89 = vmatpush1.msra.mxu0 0.0
    %90 = vmatprep.mubr.f32.mxu0 0.0
    %91 = vmatmul.mubr.f32.gmra.mrb[0].mxu0 %v24
    %v92 = vpop.f32.mrb[0].mxu0
    %v93 = vadd.f32 %v21, %v92
    %v94 = vpop.f32.mrb[0].mxu0
    %95 = vdwg.mxu0
    %v96 = vmax.f32 %v93, 0.0
    %v97 = vld [vmem:[%s1 + $0x28] sm:$0xff]
    %v98 = vld [vmem:[%s1 + $0x30] sm:$0xff]
    %v99 = vld [vmem:[%s1 + $0x38] sm:$0xff]
    %v100 = vld [vmem:[%s1 + $0x40] sm:$0xff]
    %v101 = vld [vmem:[%s1 + $0x48] sm:$0xff]
    %v102 = vld [vmem:[%s1 + $0x50] sm:$0xff]
    %v103 = vld [vmem:[%s1 + $0x58] sm:$0xff]
    %v104 = vld [vmem:[%s1 + $0x60] sm:$0xff]
    %v105 = vld [vmem:[%s1 + $0x68] sm:$0xff]
    %v106 = vld [vmem:[%s1 + $0x70] sm:$0xff]
    %v107 = vld [vmem:[%s1 + $0x78] sm:$0xff]
    %v108 = vld [vmem:[%s1 + $0x80] sm:$0xff]
    %v109 = vld [vmem:[%s1 + $0x88] sm:$0xff]
    %v110 = vld [vmem:[%s1 + $0x90] sm:$0xff]
    %v111 = vld [vmem:[%s1 + $0x98] sm:$0xff]
    %v112 = vld [vmem:[%s1 + $0xa0] sm:$0xff]
    %v113 = vld [vmem:[%s1 + $0xa8] sm:$0x1]
    %v114 = vlaneseq
    %v115 = vshrl.u32 %v114, 7
    %v116 = vsub.s32 0, %v115
    %v117 = vrot.slane %v113, %v116
    %118 = vmatprep.subr.mxu0 0.0
    %119 = vmatpush1.msra.mxu0 %v97
    %120 = vmatprep.subr.mxu0 0.0
    %121 = vmatpush1.msra.mxu0 %v98
    %122 = vmatprep.subr.mxu0 0.0
    %123 = vmatpush1.msra.mxu0 %v99
    %124 = vmatprep.subr.mxu0 0.0
    %125 = vmatpush1.msra.mxu0 %v100
    %126 = vmatprep.subr.mxu0 0.0
    %127 = vmatpush1.msra.mxu0 %v101
    %128 = vmatprep.subr.mxu0 0.0
    %129 = vmatpush1.msra.mxu0 %v102
    %130 = vmatprep.subr.mxu0 0.0
    %131 = vmatpush1.msra.mxu0 %v103
    %132 = vmatprep.subr.mxu0 0.0
    %133 = vmatpush1.msra.mxu0 %v104
    %134 = vmatprep.subr.mxu0 0.0
    %135 = vmatpush1.msra.mxu0 %v105
    %136 = vmatprep.subr.mxu0 0.0
    %137 = vmatpush1.msra.mxu0 %v106
    %138 = vmatprep.subr.mxu0 0.0
    %139 = vmatpush1.msra.mxu0 %v107
    %140 = vmatprep.subr.mxu0 0.0
    %141 = vmatpush1.msra.mxu0 %v108
    %142 = vmatprep.subr.mxu0 0.0
    %143 = vmatpush1.msra.mxu0 %v109
    %144 = vmatprep.subr.mxu0 0.0
    %145 = vmatpush1.msra.mxu0 %v110
    %146 = vmatprep.subr.mxu0 0.0
    %147 = vmatpush1.msra.mxu0 %v111
    %148 = vmatprep.subr.mxu0 0.0
    %149 = vmatpush1.msra.mxu0 %v112
    %150 = vmatprep.subr.mxu0 0.0
    %151 = vmatpush1.msra.mxu0 0.0
    %152 = vmatprep.subr.mxu0 0.0
    %153 = vmatpush1.msra.mxu0 0.0
    %154 = vmatprep.subr.mxu0 0.0
    %155 = vmatpush1.msra.mxu0 0.0
    %156 = vmatprep.subr.mxu0 0.0
    %157 = vmatpush1.msra.mxu0 0.0
    %158 = vmatprep.subr.mxu0 0.0
    %159 = vmatpush1.msra.mxu0 0.0
    %160 = vmatprep.subr.mxu0 0.0
    %161 = vmatpush1.msra.mxu0 0.0
    %162 = vmatprep.subr.mxu0 0.0
    %163 = vmatpush1.msra.mxu0 0.0
    %164 = vmatprep.subr.mxu0 0.0
    %165 = vmatpush1.msra.mxu0 0.0
    %166 = vmatprep.subr.mxu0 0.0
    %167 = vmatpush1.msra.mxu0 0.0
    %168 = vmatprep.subr.mxu0 0.0
    %169 = vmatpush1.msra.mxu0 0.0
    %170 = vmatprep.subr.mxu0 0.0
    %171 = vmatpush1.msra.mxu0 0.0
    %172 = vmatprep.subr.mxu0 0.0
    %173 = vmatpush1.msra.mxu0 0.0
    %174 = vmatprep.subr.mxu0 0.0
    %175 = vmatpush1.msra.mxu0 0.0
    %176 = vmatprep.subr.mxu0 0.0
    %177 = vmatpush1.msra.mxu0 0.0
    %178 = vmatprep.subr.mxu0 0.0
    %179 = vmatpush1.msra.mxu0 0.0
    %180 = vmatprep.subr.mxu0 0.0
    %181 = vmatpush1.msra.mxu0 0.0
    %182 = vmatprep.mubr.f32.mxu0 0.0
    %183 = vmatmul.mubr.f32.gmra.mrb[0].mxu0 %v96
    %v184 = vpop.f32.mrb[0].mxu0
    %v185 = vadd.f32 %v117, %v184
    %v186 = vpop.f32.mrb[0].mxu0
    %187 = vdwg.mxu0
    %v188 = vmax.f32 %v185, 0.0
    %v189 = vld [vmem:[%s1 + $0xb0] sm:$0xff]
    %v190 = vld [vmem:[%s1 + $0xb8] sm:$0xff]
    %v191 = vld [vmem:[%s1 + $0xc0] sm:$0xff]
    %v192 = vld [vmem:[%s1 + $0xc8] sm:$0xff]
    %v193 = vld [vmem:[%s1 + $0xd0] sm:$0xff]
    %v194 = vld [vmem:[%s1 + $0xd8] sm:$0xff]
    %v195 = vld [vmem:[%s1 + $0xe0] sm:$0xff]
    %v196 = vld [vmem:[%s1 + $0xe8] sm:$0xff]
    %v197 = vld [vmem:[%s1 + $0xf0] sm:$0xff]
    %v198 = vld [vmem:[%s1 + $0xf8] sm:$0xff]
    %v199 = vld [vmem:[%s1 + $0x100] sm:$0xff]
    %v200 = vld [vmem:[%s1 + $0x108] sm:$0xff]
    %v201 = vld [vmem:[%s1 + $0x110] sm:$0xff]
    %v202 = vld [vmem:[%s1 + $0x118] sm:$0xff]
    %v203 = vld [vmem:[%s1 + $0x120] sm:$0xff]
    %v204 = vld [vmem:[%s1 + $0x128] sm:$0xff]
    %v205 = vld [vmem:[%s1 + $0x130] sm:$0x1]
    %v206 = vlaneseq
    %v207 = vshrl.u32 %v206, 7
    %v208 = vsub.s32 0, %v207
    %v209 = vrot.slane %v205, %v208
    %210 = vmatprep.subr.mxu0 0.0
    %211 = vmatpush1.msra.mxu0 %v189
    %212 = vmatprep.subr.mxu0 0.0
    %213 = vmatpush1.msra.mxu0 %v190
    %214 = vmatprep.subr.mxu0 0.0
    %215 = vmatpush1.msra.mxu0 %v191
    %216 = vmatprep.subr.mxu0 0.0
    %217 = vmatpush1.msra.mxu0 %v192
    %218 = vmatprep.subr.mxu0 0.0
    %219 = vmatpush1.msra.mxu0 %v193
    %220 = vmatprep.subr.mxu0 0.0
    %221 = vmatpush1.msra.mxu0 %v194
    %222 = vmatprep.subr.mxu0 0.0
    %223 = vmatpush1.msra.mxu0 %v195
    %224 = vmatprep.subr.mxu0 0.0
    %225 = vmatpush1.msra.mxu0 %v196
    %226 = vmatprep.subr.mxu0 0.0
    %227 = vmatpush1.msra.mxu0 %v197
    %228 = vmatprep.subr.mxu0 0.0
    %229 = vmatpush1.msra.mxu0 %v198
    %230 = vmatprep.subr.mxu0 0.0
    %231 = vmatpush1.msra.mxu0 %v199
    %232 = vmatprep.subr.mxu0 0.0
    %233 = vmatpush1.msra.mxu0 %v200
    %234 = vmatprep.subr.mxu0 0.0
    %235 = vmatpush1.msra.mxu0 %v201
    %236 = vmatprep.subr.mxu0 0.0
    %237 = vmatpush1.msra.mxu0 %v202
    %238 = vmatprep.subr.mxu0 0.0
    %239 = vmatpush1.msra.mxu0 %v203
    %240 = vmatprep.subr.mxu0 0.0
    %241 = vmatpush1.msra.mxu0 %v204
    %242 = vmatprep.subr.mxu0 0.0
    %243 = vmatpush1.msra.mxu0 0.0
    %244 = vmatprep.subr.mxu0 0.0
    %245 = vmatpush1.msra.mxu0 0.0
    %246 = vmatprep.subr.mxu0 0.0
    %247 = vmatpush1.msra.mxu0 0.0
    %248 = vmatprep.subr.mxu0 0.0
    %249 = vmatpush1.msra.mxu0 0.0
    %250 = vmatprep.subr.mxu0 0.0
    %251 = vmatpush1.msra.mxu0 0.0
    %252 = vmatprep.subr.mxu0 0.0
    %253 = vmatpush1.msra.mxu0 0.0
    %254 = vmatprep.subr.mxu0 0.0
    %255 = vmatpush1.msra.mxu0 0.0
    %256 = vmatprep.subr.mxu0 0.0
    %257 = vmatpush1.msra.mxu0 0.0
    %258 = vmatprep.subr.mxu0 0.0
    %259 = vmatpush1.msra.mxu0 0.0
    %260 = vmatprep.subr.mxu0 0.0
    %261 = vmatpush1.msra.mxu0 0.0
    %262 = vmatprep.subr.mxu0 0.0
    %263 = vmatpush1.msra.mxu0 0.0
    %264 = vmatprep.subr.mxu0 0.0
    %265 = vmatpush1.msra.mxu0 0.0
    %266 = vmatprep.subr.mxu0 0.0
    %267 = vmatpush1.msra.mxu0 0.0
    %268 = vmatprep.subr.mxu0 0.0
    %269 = vmatpush1.msra.mxu0 0.0
    %270 = vmatprep.subr.mxu0 0.0
    %271 = vmatpush1.msra.mxu0 0.0
    %272 = vmatprep.subr.mxu0 0.0
    %273 = vmatpush1.msra.mxu0 0.0
    %274 = vmatprep.mubr.f32.mxu0 0.0
    %275 = vmatmul.mubr.f32.gmra.mrb[0].mxu0 %v188
    %v276 = vpop.f32.mrb[0].mxu0
    %v277 = vadd.f32 %v209, %v276
    %v278 = vpop.f32.mrb[0].mxu0
    %279 = vdwg.mxu0
    %v280 = vmax.f32 %v277, 0.0
    %v281 = vld [vmem:[%s1 + $0x138] sm:$0xff]
    %v282 = vld [vmem:[%s1 + $0x140] sm:$0xff]
    %v283 = vld [vmem:[%s1 + $0x148] sm:$0xff]
    %v284 = vld [vmem:[%s1 + $0x150] sm:$0xff]
    %v285 = vld [vmem:[%s1 + $0x158] sm:$0xff]
    %v286 = vld [vmem:[%s1 + $0x160] sm:$0xff]
    %v287 = vld [vmem:[%s1 + $0x168] sm:$0xff]
    %v288 = vld [vmem:[%s1 + $0x170] sm:$0xff]
    %v289 = vld [vmem:[%s1 + $0x178] sm:$0xff]
    %v290 = vld [vmem:[%s1 + $0x180] sm:$0xff]
    %v291 = vld [vmem:[%s1 + $0x188] sm:$0xff]
    %v292 = vld [vmem:[%s1 + $0x190] sm:$0xff]
    %v293 = vld [vmem:[%s1 + $0x198] sm:$0xff]
    %v294 = vld [vmem:[%s1 + $0x1a0] sm:$0xff]
    %v295 = vld [vmem:[%s1 + $0x1a8] sm:$0xff]
    %v296 = vld [vmem:[%s1 + $0x1b0] sm:$0xff]
    %v297 = vld [vmem:[%s1 + $0x1b8] sm:$0x1]
    %v298 = vlaneseq
    %v299 = vshrl.u32 %v298, 7
    %v300 = vsub.s32 0, %v299
    %v301 = vrot.slane %v297, %v300
    %302 = vmatprep.subr.mxu0 0.0
    %303 = vmatpush1.msra.mxu0 %v281
    %304 = vmatprep.subr.mxu0 0.0
    %305 = vmatpush1.msra.mxu0 %v282
    %306 = vmatprep.subr.mxu0 0.0
    %307 = vmatpush1.msra.mxu0 %v283
    %308 = vmatprep.subr.mxu0 0.0
    %309 = vmatpush1.msra.mxu0 %v284
    %310 = vmatprep.subr.mxu0 0.0
    %311 = vmatpush1.msra.mxu0 %v285
    %312 = vmatprep.subr.mxu0 0.0
    %313 = vmatpush1.msra.mxu0 %v286
    %314 = vmatprep.subr.mxu0 0.0
    %315 = vmatpush1.msra.mxu0 %v287
    %316 = vmatprep.subr.mxu0 0.0
    %317 = vmatpush1.msra.mxu0 %v288
    %318 = vmatprep.subr.mxu0 0.0
    %319 = vmatpush1.msra.mxu0 %v289
    %320 = vmatprep.subr.mxu0 0.0
    %321 = vmatpush1.msra.mxu0 %v290
    %322 = vmatprep.subr.mxu0 0.0
    %323 = vmatpush1.msra.mxu0 %v291
    %324 = vmatprep.subr.mxu0 0.0
    %325 = vmatpush1.msra.mxu0 %v292
    %326 = vmatprep.subr.mxu0 0.0
    %327 = vmatpush1.msra.mxu0 %v293
    %328 = vmatprep.subr.mxu0 0.0
    %329 = vmatpush1.msra.mxu0 %v294
    %330 = vmatprep.subr.mxu0 0.0
    %331 = vmatpush1.msra.mxu0 %v295
    %332 = vmatprep.subr.mxu0 0.0
    %333 = vmatpush1.msra.mxu0 %v296
    %334 = vmatprep.subr.mxu0 0.0
    %335 = vmatpush1.msra.mxu0 0.0
    %336 = vmatprep.subr.mxu0 0.0
    %337 = vmatpush1.msra.mxu0 0.0
    %338 = vmatprep.subr.mxu0 0.0
    %339 = vmatpush1.msra.mxu0 0.0
    %340 = vmatprep.subr.mxu0 0.0
    %341 = vmatpush1.msra.mxu0 0.0
    %342 = vmatprep.subr.mxu0 0.0
    %343 = vmatpush1.msra.mxu0 0.0
    %344 = vmatprep.subr.mxu0 0.0
    %345 = vmatpush1.msra.mxu0 0.0
    %346 = vmatprep.subr.mxu0 0.0
    %347 = vmatpush1.msra.mxu0 0.0
    %348 = vmatprep.subr.mxu0 0.0
    %349 = vmatpush1.msra.mxu0 0.0
    %350 = vmatprep.subr.mxu0 0.0
    %351 = vmatpush1.msra.mxu0 0.0
    %352 = vmatprep.subr.mxu0 0.0
    %353 = vmatpush1.msra.mxu0 0.0
    %354 = vmatprep.subr.mxu0 0.0
    %355 = vmatpush1.msra.mxu0 0.0
    %356 = vmatprep.subr.mxu0 0.0
    %357 = vmatpush1.msra.mxu0 0.0
    %358 = vmatprep.subr.mxu0 0.0
    %359 = vmatpush1.msra.mxu0 0.0
    %360 = vmatprep.subr.mxu0 0.0
    %361 = vmatpush1.msra.mxu0 0.0
    %362 = vmatprep.subr.mxu0 0.0
    %363 = vmatpush1.msra.mxu0 0.0
    %364 = vmatprep.subr.mxu0 0.0
    %365 = vmatpush1.msra.mxu0 0.0
    %366 = vmatprep.mubr.f32.mxu0 0.0
    %367 = vmatmul.mubr.f32.gmra.mrb[0].mxu0 %v280
    %v368 = vpop.f32.mrb[0].mxu0
    %v369 = vadd.f32 %v301, %v368
    %v370 = vpop.f32.mrb[0].mxu0
    %371 = vdwg.mxu0
    %vm372 = vcmask 64512
    %373 = vst.msk [vmem:[#allocation2] sm:$0xff] %vm372, %v369
    // Predicated region
    $region10: #{mlp_forward.1} parent=1 // pred_check
      _
    $region11: #{mlp_forward.1} parent=1 // pred_check_branch
      %375 = sbr.rel (0) target = $region13
    $region12: #{mlp_forward.1} parent=1 // pred_region
      %s377 = ssub.s32 128, 128
      %378 = vsyncadd [#allocation3], %s377
      %s380 = sshll.u32 [#allocation2], 4
      %s381 = int_to_ptr.vmem [resolvable:$true] %s380
      %383 = dma.vmem_to_hbm [thread:$0]  %s381, 128, %s2, [#allocation3]
    $region13: #{mlp_forward.1} parent=1 // pred_fallthru
      _
    // Predicated region
    $region14: #{mlp_forward.1} parent=1 // pred_check
      _
    $region15: #{mlp_forward.1} parent=1 // pred_check_branch
      %385 = sbr.rel (0) target = $region17
    $region16: #{mlp_forward.1} parent=1 // pred_region
      %386 = dma.done [#allocation3], 128
    $region17: #{mlp_forward.1} parent=1 // pred_fallthru
      _
    %387 = vsyncpa [#allocation3], 1

</llo_original>
